<compile_context>
chip_gen: v7x
topology: tpu7x:2x2x1
jax: 0.10.0
libtpu: 0.0.40
codegen_flags: <defaults>
</compile_context>

<pallas_src>
import jax
import jax.numpy as jnp
from jax.experimental import pallas as pl
from jax.experimental.pallas import tpu as pltpu


def wrapped_fwd_kernel(w_ref, b_ref, feat_ref, o_ref):
    # w_ref : SMEM (3, 6)      effective 1x1-conv weights (255 scales folded in)
    # b_ref : SMEM (3,)        effective bias (*255 folded in)
    # feat_ref : VMEM (6, rows, L)  downsampled planar channels (lane-dense)
    # o_ref    : VMEM (4, rows, L)  RGBA output, clipped to [0, 255]
    f = [feat_ref[k] for k in range(6)]          # hoisted: six slab loads total
    for c in range(3):
        acc = f[0] * w_ref[c, 0] + b_ref[c]
        for k in range(1, 6):
            acc = acc + f[k] * w_ref[c, k]
        o_ref[c] = jnp.clip(acc, 0.0, 255.0)
    # torch.cat alpha(=1) channel + *255 + clip  ==  constant 255 store.
    o_ref[3] = jnp.full(o_ref.shape[1:], 255.0, dtype=jnp.float32)


def wrapped_model_forward(source, w, b, *, target_block_px=256 * 1024, lanes=512):
    """source: (H, W, 6) float32 HWC.  Returns (H//4, W//4, 4) float32 HWC."""
    H, W, C = source.shape
    assert C == 6 and H % 4 == 0 and W % 4 == 0
    Hd, Wd = H // 4, W // 4
    npix = Hd * Wd

    # 1/4 bilinear downsample (align_corners=False, antialias=False): source
    # coord of out pixel i is 4*i + 1.5 -> taps (4i+1, 4i+2), weight 0.25 each.
    # Slice-then-transpose: the taps are gathered straight from HWC `source`,
    # so no full-resolution (6, H, W) intermediate is materialized.
    taps = (source[1::4, 1::4, :] + source[1::4, 2::4, :]
            + source[2::4, 1::4, :] + source[2::4, 2::4, :])       # (Hd, Wd, 6)
    feat_hwc = 0.25 * taps

    # Lane-dense repack: planar channels, pixels flattened into rows of `lanes`
    # (multiple of 128) so every kernel vld/vst is unmasked regardless of Wd.
    # Padding pixels are zeros and are sliced away after the kernel.
    L = lanes
    assert L % 128 == 0
    npad = pl.cdiv(npix, L) * L
    R = npad // L
    feat = jnp.transpose(feat_hwc.reshape(npix, 6), (1, 0))        # (6, npix)
    if npad != npix:
        feat = jnp.pad(feat, ((0, 0), (0, npad - npix)))
    feat = feat.reshape(6, R, L)                                   # (6, R, L)

    # Fold /255 (rgb input) and *255 (output) scales into the conv params.
    w_eff = jnp.concatenate([w[:, 0:3], w[:, 3:6] * 255.0], axis=1)  # (3, 6)
    b_eff = b.reshape(3) * 255.0                                     # (3,)

    # Row-block sizing: ~target_block_px pixels per grid step (amortizes the
    # ~0.35us/step overhead); rows a multiple of 8; when multi-block, keep the
    # block count even (best effort) so v7x's two TensorCores stay balanced.
    if R * L <= target_block_px or R <= 8:
        rows = R
    else:
        rows = min(R, max(8, (target_block_px // L) // 8 * 8))
        nblk = pl.cdiv(R, rows)
        if nblk > 1 and nblk % 2 == 1:
            rows = max(8, pl.cdiv(pl.cdiv(R, nblk + 1), 8) * 8)
    grid = (pl.cdiv(R, rows),)

    out = pl.pallas_call(
        wrapped_fwd_kernel,
        out_shape=jax.ShapeDtypeStruct((4, R, L), jnp.float32),
        grid=grid,
        in_specs=[
            pl.BlockSpec(memory_space=pltpu.MemorySpace.SMEM),      # w_eff
            pl.BlockSpec(memory_space=pltpu.MemorySpace.SMEM),      # b_eff
            pl.BlockSpec((6, rows, L), lambda i: (0, i, 0)),        # feat
        ],
        out_specs=pl.BlockSpec((4, rows, L), lambda i: (0, i, 0)),
        compiler_params=pltpu.CompilerParams(
            dimension_semantics=("parallel",),
            # Double-buffered in+out block footprint at default sizing ~20 MB;
            # 48 MiB is safe on every generation (v7x has 64 MiB per TC).
            vmem_limit_bytes=48 * 1024 * 1024,
        ),
    )(w_eff, b_eff, feat)

    # Un-pad and return (Hd, Wd, 4) HWC  (== PyTorch .permute(1, 2, 0)).
    out = out.reshape(4, npad)[:, :npix].reshape(4, Hd, Wd)
    return jnp.transpose(out, (1, 2, 0))


def reference_forward(source, w, b):
    """Plain-JAX reference following the exact PyTorch op order."""
    H, W, _ = source.shape
    x = jnp.transpose(source, (2, 0, 1))[None, None]              # (1,1,6,H,W)
    rgb = x[:, :, 0:3] / 255.0
    depth = x[:, :, 3:4]
    motion = x[:, :, 4:6]
    feat = jnp.concatenate([rgb, depth, motion], axis=2)[:, 0]    # (1,6,H,W)
    recon = jnp.einsum('oc,nchw->nohw', w, feat) + b.reshape(1, 3, 1, 1)
    alpha = jnp.ones((1, 1, H, W), jnp.float32)
    recon = jnp.concatenate([recon, alpha], axis=1)               # (1,4,H,W)
    # bilinear 1/4, align_corners=False: taps (4i+1, 4i+2), weight 0.25 each
    ds = 0.25 * (recon[:, :, 1::4, 1::4] + recon[:, :, 1::4, 2::4]
                 + recon[:, :, 2::4, 1::4] + recon[:, :, 2::4, 2::4])
    out = jnp.transpose(ds[0], (1, 2, 0))                         # (H/4, W/4, 4)
    return jnp.clip(out * 255.0, 0.0, 255.0)


if __name__ == "__main__":
    key = jax.random.PRNGKey(0)
    k_w, k_b, k_src = jax.random.split(key, 3)

    # Deterministic synthetic 1x1-conv (6 -> 3) parameters.
    w = 0.3 * jax.random.normal(k_w, (3, 6), jnp.float32)
    b = 0.05 * jax.random.normal(k_b, (3, 1), jnp.float32)

    # (H, W, kwargs) — the overrides force small lane rows / row blocks so the
    # multi-block, even-grid, ragged-last-block, and pixel-padding paths are
    # all exercised at small shapes.
    cases = [
        (16, 16, {}),                                        # pad 16->512, grid=(1,)
        (80, 96, {}),                                        # pad 480->512, grid=(1,)
        (256, 256, dict(lanes=128, target_block_px=1024)),   # R=32, rows=8, grid=(4,)
        (192, 320, dict(lanes=128, target_block_px=1024)),   # R=30, ragged last block
    ]

    for idx, (H, W, kwargs) in enumerate(cases):
        k_rgb, k_dep, k_mot = jax.random.split(jax.random.fold_in(k_src, idx), 3)
        # source channels: RGB in [0, 255], depth in [0, 1], motion in [-1, 1]
        rgb = jax.random.uniform(k_rgb, (H, W, 3), jnp.float32, 0.0, 255.0)
        depth = jax.random.uniform(k_dep, (H, W, 1), jnp.float32, 0.0, 1.0)
        motion = jax.random.uniform(k_mot, (H, W, 2), jnp.float32, -1.0, 1.0)
        source = jnp.concatenate([rgb, depth, motion], axis=-1)   # (H, W, 6)

        out = jax.block_until_ready(wrapped_model_forward(source, w, b, **kwargs))
        ref = reference_forward(source, w, b)

        assert out.shape == (H // 4, W // 4, 4), out.shape
        max_err = float(jnp.max(jnp.abs(out - ref)))
        assert jnp.allclose(out, ref, atol=1e-3, rtol=1e-4), \
            f"case {idx} (H={H}, W={W}): max_err={max_err}"

    print("KERNEL_OK")
</pallas_src>

<mosaic_0001>
module attributes {stable_mosaic.version = 11 : i64} {
  func.func @wrapped_fwd_kernel(%arg0: i32, %arg1: memref<3x6xf32, #tpu.memory_space<smem>>, %arg2: memref<3xf32, #tpu.memory_space<smem>>, %arg3: memref<6x1x512xf32, #tpu.memory_space<vmem>>, %arg4: memref<4x1x512xf32, #tpu.memory_space<vmem>>) attributes {dimension_semantics = [#tpu.dimension_semantics<parallel>], iteration_bounds = array<i64: 1>, scalar_prefetch = 0 : i64, scratch_operands = 0 : i64, tpu.core_type = #tpu.core_type<tc>, window_params = [{transform_indices = @transform_0, window_bounds = array<i64: 3, 6>}, {transform_indices = @transform_1, window_bounds = array<i64: 3>}, {transform_indices = @transform_2, window_bounds = array<i64: 6, 1, 512>}, {transform_indices = @transform_3, window_bounds = array<i64: 4, 1, 512>}]} {
    %c0 = arith.constant 0 : index
    %c0_0 = arith.constant 0 : index
    %c0_1 = arith.constant 0 : index
    %0 = vector.load %arg3[%c0, %c0_0, %c0_1] : memref<6x1x512xf32, #tpu.memory_space<vmem>>, vector<1x1x512xf32>
    %1 = vector.shape_cast %0 : vector<1x1x512xf32> to vector<1x512xf32>
    %c1 = arith.constant 1 : index
    %c0_2 = arith.constant 0 : index
    %c0_3 = arith.constant 0 : index
    %2 = vector.load %arg3[%c1, %c0_2, %c0_3] : memref<6x1x512xf32, #tpu.memory_space<vmem>>, vector<1x1x512xf32>
    %3 = vector.shape_cast %2 : vector<1x1x512xf32> to vector<1x512xf32>
    %c2 = arith.constant 2 : index
    %c0_4 = arith.constant 0 : index
    %c0_5 = arith.constant 0 : index
    %4 = vector.load %arg3[%c2, %c0_4, %c0_5] : memref<6x1x512xf32, #tpu.memory_space<vmem>>, vector<1x1x512xf32>
    %5 = vector.shape_cast %4 : vector<1x1x512xf32> to vector<1x512xf32>
    %c3 = arith.constant 3 : index
    %c0_6 = arith.constant 0 : index
    %c0_7 = arith.constant 0 : index
    %6 = vector.load %arg3[%c3, %c0_6, %c0_7] : memref<6x1x512xf32, #tpu.memory_space<vmem>>, vector<1x1x512xf32>
    %7 = vector.shape_cast %6 : vector<1x1x512xf32> to vector<1x512xf32>
    %c4 = arith.constant 4 : index
    %c0_8 = arith.constant 0 : index
    %c0_9 = arith.constant 0 : index
    %8 = vector.load %arg3[%c4, %c0_8, %c0_9] : memref<6x1x512xf32, #tpu.memory_space<vmem>>, vector<1x1x512xf32>
    %9 = vector.shape_cast %8 : vector<1x1x512xf32> to vector<1x512xf32>
    %c5 = arith.constant 5 : index
    %c0_10 = arith.constant 0 : index
    %c0_11 = arith.constant 0 : index
    %10 = vector.load %arg3[%c5, %c0_10, %c0_11] : memref<6x1x512xf32, #tpu.memory_space<vmem>>, vector<1x1x512xf32>
    %11 = vector.shape_cast %10 : vector<1x1x512xf32> to vector<1x512xf32>
    %c0_12 = arith.constant 0 : index
    %c0_13 = arith.constant 0 : index
    %12 = memref.load %arg1[%c0_12, %c0_13] : memref<3x6xf32, #tpu.memory_space<smem>>
    %13 = vector.broadcast %12 : f32 to vector<1x512xf32>
    %14 = arith.mulf %1, %13 : vector<1x512xf32>
    %c0_14 = arith.constant 0 : index
    %15 = memref.load %arg2[%c0_14] : memref<3xf32, #tpu.memory_space<smem>>
    %16 = vector.broadcast %15 : f32 to vector<1x512xf32>
    %17 = arith.addf %14, %16 : vector<1x512xf32>
    %c0_15 = arith.constant 0 : index
    %c1_16 = arith.constant 1 : index
    %18 = memref.load %arg1[%c0_15, %c1_16] : memref<3x6xf32, #tpu.memory_space<smem>>
    %19 = vector.broadcast %18 : f32 to vector<1x512xf32>
    %20 = arith.mulf %3, %19 : vector<1x512xf32>
    %21 = arith.addf %17, %20 : vector<1x512xf32>
    %c0_17 = arith.constant 0 : index
    %c2_18 = arith.constant 2 : index
    %22 = memref.load %arg1[%c0_17, %c2_18] : memref<3x6xf32, #tpu.memory_space<smem>>
    %23 = vector.broadcast %22 : f32 to vector<1x512xf32>
    %24 = arith.mulf %5, %23 : vector<1x512xf32>
    %25 = arith.addf %21, %24 : vector<1x512xf32>
    %c0_19 = arith.constant 0 : index
    %c3_20 = arith.constant 3 : index
    %26 = memref.load %arg1[%c0_19, %c3_20] : memref<3x6xf32, #tpu.memory_space<smem>>
    %27 = vector.broadcast %26 : f32 to vector<1x512xf32>
    %28 = arith.mulf %7, %27 : vector<1x512xf32>
    %29 = arith.addf %25, %28 : vector<1x512xf32>
    %c0_21 = arith.constant 0 : index
    %c4_22 = arith.constant 4 : index
    %30 = memref.load %arg1[%c0_21, %c4_22] : memref<3x6xf32, #tpu.memory_space<smem>>
    %31 = vector.broadcast %30 : f32 to vector<1x512xf32>
    %32 = arith.mulf %9, %31 : vector<1x512xf32>
    %33 = arith.addf %29, %32 : vector<1x512xf32>
    %c0_23 = arith.constant 0 : index
    %c5_24 = arith.constant 5 : index
    %34 = memref.load %arg1[%c0_23, %c5_24] : memref<3x6xf32, #tpu.memory_space<smem>>
    %35 = vector.broadcast %34 : f32 to vector<1x512xf32>
    %36 = arith.mulf %11, %35 : vector<1x512xf32>
    %37 = arith.addf %33, %36 : vector<1x512xf32>
    %cst = arith.constant 0.000000e+00 : f32
    %cst_25 = arith.constant 2.550000e+02 : f32
    %38 = vector.broadcast %cst : f32 to vector<1x512xf32>
    %39 = arith.maximumf %38, %37 : vector<1x512xf32>
    %40 = vector.broadcast %cst_25 : f32 to vector<1x512xf32>
    %41 = arith.minimumf %40, %39 : vector<1x512xf32>
    %c0_26 = arith.constant 0 : index
    %c0_27 = arith.constant 0 : index
    %c0_28 = arith.constant 0 : index
    %42 = vector.load %arg4[%c0_26, %c0_27, %c0_28] : memref<4x1x512xf32, #tpu.memory_space<vmem>>, vector<1x1x512xf32>
    %43 = vector.shape_cast %42 : vector<1x1x512xf32> to vector<1x512xf32>
    %44 = vector.shape_cast %41 : vector<1x512xf32> to vector<1x1x512xf32>
    tpu.vector_store %arg4[%c0_26, %c0_27, %c0_28], %44 {strides = array<i32>} : memref<4x1x512xf32, #tpu.memory_space<vmem>>, vector<1x1x512xf32>,
    %c1_29 = arith.constant 1 : index
    %c0_30 = arith.constant 0 : index
    %45 = memref.load %arg1[%c1_29, %c0_30] : memref<3x6xf32, #tpu.memory_space<smem>>
    %46 = vector.broadcast %45 : f32 to vector<1x512xf32>
    %47 = arith.mulf %1, %46 : vector<1x512xf32>
    %c1_31 = arith.constant 1 : index
    %48 = memref.load %arg2[%c1_31] : memref<3xf32, #tpu.memory_space<smem>>
    %49 = vector.broadcast %48 : f32 to vector<1x512xf32>
    %50 = arith.addf %47, %49 : vector<1x512xf32>
    %c1_32 = arith.constant 1 : index
    %c1_33 = arith.constant 1 : index
    %51 = memref.load %arg1[%c1_32, %c1_33] : memref<3x6xf32, #tpu.memory_space<smem>>
    %52 = vector.broadcast %51 : f32 to vector<1x512xf32>
    %53 = arith.mulf %3, %52 : vector<1x512xf32>
    %54 = arith.addf %50, %53 : vector<1x512xf32>
    %c1_34 = arith.constant 1 : index
    %c2_35 = arith.constant 2 : index
    %55 = memref.load %arg1[%c1_34, %c2_35] : memref<3x6xf32, #tpu.memory_space<smem>>
    %56 = vector.broadcast %55 : f32 to vector<1x512xf32>
    %57 = arith.mulf %5, %56 : vector<1x512xf32>
    %58 = arith.addf %54, %57 : vector<1x512xf32>
    %c1_36 = arith.constant 1 : index
    %c3_37 = arith.constant 3 : index
    %59 = memref.load %arg1[%c1_36, %c3_37] : memref<3x6xf32, #tpu.memory_space<smem>>
    %60 = vector.broadcast %59 : f32 to vector<1x512xf32>
    %61 = arith.mulf %7, %60 : vector<1x512xf32>
    %62 = arith.addf %58, %61 : vector<1x512xf32>
    %c1_38 = arith.constant 1 : index
    %c4_39 = arith.constant 4 : index
    %63 = memref.load %arg1[%c1_38, %c4_39] : memref<3x6xf32, #tpu.memory_space<smem>>
    %64 = vector.broadcast %63 : f32 to vector<1x512xf32>
    %65 = arith.mulf %9, %64 : vector<1x512xf32>
    %66 = arith.addf %62, %65 : vector<1x512xf32>
    %c1_40 = arith.constant 1 : index
    %c5_41 = arith.constant 5 : index
    %67 = memref.load %arg1[%c1_40, %c5_41] : memref<3x6xf32, #tpu.memory_space<smem>>
    %68 = vector.broadcast %67 : f32 to vector<1x512xf32>
    %69 = arith.mulf %11, %68 : vector<1x512xf32>
    %70 = arith.addf %66, %69 : vector<1x512xf32>
    %cst_42 = arith.constant 0.000000e+00 : f32
    %cst_43 = arith.constant 2.550000e+02 : f32
    %71 = vector.broadcast %cst_42 : f32 to vector<1x512xf32>
    %72 = arith.maximumf %71, %70 : vector<1x512xf32>
    %73 = vector.broadcast %cst_43 : f32 to vector<1x512xf32>
    %74 = arith.minimumf %73, %72 : vector<1x512xf32>
    %c1_44 = arith.constant 1 : index
    %c0_45 = arith.constant 0 : index
    %c0_46 = arith.constant 0 : index
    %75 = vector.load %arg4[%c1_44, %c0_45, %c0_46] : memref<4x1x512xf32, #tpu.memory_space<vmem>>, vector<1x1x512xf32>
    %76 = vector.shape_cast %75 : vector<1x1x512xf32> to vector<1x512xf32>
    %77 = vector.shape_cast %74 : vector<1x512xf32> to vector<1x1x512xf32>
    tpu.vector_store %arg4[%c1_44, %c0_45, %c0_46], %77 {strides = array<i32>} : memref<4x1x512xf32, #tpu.memory_space<vmem>>, vector<1x1x512xf32>,
    %c2_47 = arith.constant 2 : index
    %c0_48 = arith.constant 0 : index
    %78 = memref.load %arg1[%c2_47, %c0_48] : memref<3x6xf32, #tpu.memory_space<smem>>
    %79 = vector.broadcast %78 : f32 to vector<1x512xf32>
    %80 = arith.mulf %1, %79 : vector<1x512xf32>
    %c2_49 = arith.constant 2 : index
    %81 = memref.load %arg2[%c2_49] : memref<3xf32, #tpu.memory_space<smem>>
    %82 = vector.broadcast %81 : f32 to vector<1x512xf32>
    %83 = arith.addf %80, %82 : vector<1x512xf32>
    %c2_50 = arith.constant 2 : index
    %c1_51 = arith.constant 1 : index
    %84 = memref.load %arg1[%c2_50, %c1_51] : memref<3x6xf32, #tpu.memory_space<smem>>
    %85 = vector.broadcast %84 : f32 to vector<1x512xf32>
    %86 = arith.mulf %3, %85 : vector<1x512xf32>
    %87 = arith.addf %83, %86 : vector<1x512xf32>
    %c2_52 = arith.constant 2 : index
    %c2_53 = arith.constant 2 : index
    %88 = memref.load %arg1[%c2_52, %c2_53] : memref<3x6xf32, #tpu.memory_space<smem>>
    %89 = vector.broadcast %88 : f32 to vector<1x512xf32>
    %90 = arith.mulf %5, %89 : vector<1x512xf32>
    %91 = arith.addf %87, %90 : vector<1x512xf32>
    %c2_54 = arith.constant 2 : index
    %c3_55 = arith.constant 3 : index
    %92 = memref.load %arg1[%c2_54, %c3_55] : memref<3x6xf32, #tpu.memory_space<smem>>
    %93 = vector.broadcast %92 : f32 to vector<1x512xf32>
    %94 = arith.mulf %7, %93 : vector<1x512xf32>
    %95 = arith.addf %91, %94 : vector<1x512xf32>
    %c2_56 = arith.constant 2 : index
    %c4_57 = arith.constant 4 : index
    %96 = memref.load %arg1[%c2_56, %c4_57] : memref<3x6xf32, #tpu.memory_space<smem>>
    %97 = vector.broadcast %96 : f32 to vector<1x512xf32>
    %98 = arith.mulf %9, %97 : vector<1x512xf32>
    %99 = arith.addf %95, %98 : vector<1x512xf32>
    %c2_58 = arith.constant 2 : index
    %c5_59 = arith.constant 5 : index
    %100 = memref.load %arg1[%c2_58, %c5_59] : memref<3x6xf32, #tpu.memory_space<smem>>
    %101 = vector.broadcast %100 : f32 to vector<1x512xf32>
    %102 = arith.mulf %11, %101 : vector<1x512xf32>
    %103 = arith.addf %99, %102 : vector<1x512xf32>
    %cst_60 = arith.constant 0.000000e+00 : f32
    %cst_61 = arith.constant 2.550000e+02 : f32
    %104 = vector.broadcast %cst_60 : f32 to vector<1x512xf32>
    %105 = arith.maximumf %104, %103 : vector<1x512xf32>
    %106 = vector.broadcast %cst_61 : f32 to vector<1x512xf32>
    %107 = arith.minimumf %106, %105 : vector<1x512xf32>
    %c2_62 = arith.constant 2 : index
    %c0_63 = arith.constant 0 : index
    %c0_64 = arith.constant 0 : index
    %108 = vector.load %arg4[%c2_62, %c0_63, %c0_64] : memref<4x1x512xf32, #tpu.memory_space<vmem>>, vector<1x1x512xf32>
    %109 = vector.shape_cast %108 : vector<1x1x512xf32> to vector<1x512xf32>
    %110 = vector.shape_cast %107 : vector<1x512xf32> to vector<1x1x512xf32>
    tpu.vector_store %arg4[%c2_62, %c0_63, %c0_64], %110 {strides = array<i32>} : memref<4x1x512xf32, #tpu.memory_space<vmem>>, vector<1x1x512xf32>,
    %cst_65 = arith.constant 2.550000e+02 : f32
    %111 = vector.broadcast %cst_65 : f32 to vector<1x512xf32>
    %c3_66 = arith.constant 3 : index
    %c0_67 = arith.constant 0 : index
    %c0_68 = arith.constant 0 : index
    %112 = vector.load %arg4[%c3_66, %c0_67, %c0_68] : memref<4x1x512xf32, #tpu.memory_space<vmem>>, vector<1x1x512xf32>
    %113 = vector.shape_cast %112 : vector<1x1x512xf32> to vector<1x512xf32>
    %114 = vector.shape_cast %111 : vector<1x512xf32> to vector<1x1x512xf32>
    tpu.vector_store %arg4[%c3_66, %c0_67, %c0_68], %114 {strides = array<i32>} : memref<4x1x512xf32, #tpu.memory_space<vmem>>, vector<1x1x512xf32>,
    return
  }
  func.func @transform_0(%arg0: i32) -> (i32, i32) {
    %c0_i32 = arith.constant 0 : i32
    %c0_i32_0 = arith.constant 0 : i32
    %c0_i32_1 = arith.constant 0 : i32
    return %c0_i32, %c0_i32_0 : i32, i32
  }
  func.func @transform_1(%arg0: i32) -> i32 {
    %c0_i32 = arith.constant 0 : i32
    %c0_i32_0 = arith.constant 0 : i32
    return %c0_i32 : i32
  }
  func.func @transform_2(%arg0: i32) -> (i32, i32, i32) {
    %c0_i32 = arith.constant 0 : i32
    %c0_i32_0 = arith.constant 0 : i32
    %c0_i32_1 = arith.constant 0 : i32
    return %c0_i32, %arg0, %c0_i32_0 : i32, i32, i32
  }
  func.func @transform_3(%arg0: i32) -> (i32, i32, i32) {
    %c0_i32 = arith.constant 0 : i32
    %c0_i32_0 = arith.constant 0 : i32
    %c0_i32_1 = arith.constant 0 : i32
    return %c0_i32, %arg0, %c0_i32_0 : i32, i32, i32
  }
}

</mosaic_0001>

<llo_original>
// kernel: tpu_custom_call.1
$region0: #{tpu_custom_call.1}
  #allocation0 [shape = 'u32[]', space=smem, size = 0x4, offset = 0x4, fixed_abs, tag = 'smem constant byte address 0x4 - core index']
  #allocation1 [shape = 'u32[144,128]{1,0:T(1,128)}', space=vmem, size = 0x12000, scoped, tag = 'internal scratch']
  %s0 = inlined_call_operand.hbm [shape: f32[3,6], index: 0, kind: input, shape index: {}]
  %s1 = inlined_call_operand.vmem [shape: f32[3], index: 1, kind: input, shape index: {}]
  %s2 = inlined_call_operand.hbm [shape: f32[6,1,512], index: 2, kind: input, shape index: {}]
  %s3 = inlined_call_operand.hbm [shape: f32[4,1,512], index: 3, kind: output, shape index: {}]
  %s4 = sld [smem:[#allocation0]]
  $region34: #{tpu_custom_call.1} parent=0
    _
  %s6 = ssub.s32 1, %s4
  %s7 = scalar_select 0, %s6, %s4
  $region1: #{tpu_custom_call.1} parent=0
    #allocation2 [shape = 'u8[2048]{0}', space=smem, size = 0x800, scoped, tag = 'input window, operand 0, single buffered']
    #allocation3 [shape = 's32[1]{0}', space=sflag, size = 0x4, scoped, tag = 'scoped memory for tpu_custom_call.1']
    #allocation4 [shape = 's32[1]{0}', space=sflag, size = 0x4, scoped, tag = 'scoped memory for tpu_custom_call.1']
    #allocation5 [shape = 's32[1]{0}', space=sflag, size = 0x4, scoped, tag = 'scoped memory for tpu_custom_call.1']
    #allocation6 [shape = 's32[1]{0}', space=sflag, size = 0x4, scoped, tag = 'scoped memory for tpu_custom_call.1']
    #allocation7 [shape = 'u8[512]{0}', space=smem, size = 0x200, scoped, tag = 'input window, operand 1, single buffered']
    #allocation8 [shape = 'u8[12288]{0}', space=vmem, size = 0x3000, scoped, tag = 'input window, operand 2, single buffered']
    #allocation9 [shape = 'u8[8192]{0}', space=vmem, size = 0x2000, scoped, tag = 'output window, operand 0, single buffered']
    %8 = vsyncpa [#allocation5], 0
    %9 = vsyncpa [#allocation6], 0
    %10 = vsyncpa [#allocation3], 0
    %11 = vsyncpa [#allocation4], 0
    // Predicated region
    $region2: #{tpu_custom_call.1} parent=1 // pred_check
      _
    $region3: #{tpu_custom_call.1} parent=1 // pred_check_branch
      %13 = sbr.rel (0) target = $region5
    $region4: #{tpu_custom_call.1} parent=1 // pred_region
      %s15 = ssub.s32 64, 64
      %16 = vsyncadd [#allocation5], %s15
      %19 = dma.hbm_to_smem %s0, 64, [#allocation2], [#allocation5]
    $region5: #{tpu_custom_call.1} parent=1 // pred_fallthru
      _
    // Predicated region
    $region6: #{tpu_custom_call.1} parent=1 // pred_check
      _
    $region7: #{tpu_custom_call.1} parent=1 // pred_check_branch
      %21 = sbr.rel (0) target = $region9
    $region8: #{tpu_custom_call.1} parent=1 // pred_region
      %s23 = ssub.s32 16, 16
      %24 = vsyncadd [#allocation6], %s23
      %s26 = sshll.u32 %s1, 4
      %s27 = int_to_ptr.vmem [resolvable:$true] %s26
      %29 = dma.vmem_to_smem %s27, 16, [#allocation7], [#allocation6]
    $region9: #{tpu_custom_call.1} parent=1 // pred_fallthru
      _
    // Predicated region
    $region10: #{tpu_custom_call.1} parent=1 // pred_check
      _
    $region11: #{tpu_custom_call.1} parent=1 // pred_check_branch
      %31 = sbr.rel (0) target = $region13
    $region12: #{tpu_custom_call.1} parent=1 // pred_region
      %s33 = ssub.s32 384, 384
      %34 = vsyncadd [#allocation3], %s33
      %s35 = sshll.u32 [#allocation8], 4
      %s36 = int_to_ptr.vmem [resolvable:$true] %s35
      %41 = dma.hbm_to_vmem [thread:$0]  %s2, 384, %s36, [#allocation3], 64, 64, 4
    $region13: #{tpu_custom_call.1} parent=1 // pred_fallthru
      _
    // Predicated region
    $region14: #{tpu_custom_call.1} parent=1 // pred_check
      _
    $region15: #{tpu_custom_call.1} parent=1 // pred_check_branch
      %43 = sbr.rel (0) target = $region17
    $region16: #{tpu_custom_call.1} parent=1 // pred_region
      %44 = dma.done [#allocation5], 64
    $region17: #{tpu_custom_call.1} parent=1 // pred_fallthru
      _
    // Predicated region
    $region18: #{tpu_custom_call.1} parent=1 // pred_check
      _
    $region19: #{tpu_custom_call.1} parent=1 // pred_check_branch
      %46 = sbr.rel (0) target = $region21
    $region20: #{tpu_custom_call.1} parent=1 // pred_region
      %47 = dma.done [#allocation6], 16
    $region21: #{tpu_custom_call.1} parent=1 // pred_fallthru
      _
    // Predicated region
    $region22: #{tpu_custom_call.1} parent=1 // pred_check
      _
    $region23: #{tpu_custom_call.1} parent=1 // pred_check_branch
      %49 = sbr.rel (0) target = $region25
    $region24: #{tpu_custom_call.1} parent=1 // pred_region
      %50 = dma.done [#allocation3], 384
    $region25: #{tpu_custom_call.1} parent=1 // pred_fallthru
      _
    %51 = sfence
    %v52 = vld [vmem:[#allocation8] sm:$0xf]
    %s53 = scalar_lea.vmem [#allocation8], 4
    %v54 = vld [vmem:[%s53] sm:$0xf]
    %s55 = scalar_lea.vmem [#allocation8], 8
    %v56 = vld [vmem:[%s55] sm:$0xf]
    %s57 = scalar_lea.vmem [#allocation8], 12
    %v58 = vld [vmem:[%s57] sm:$0xf]
    %s59 = scalar_lea.vmem [#allocation8], 16
    %v60 = vld [vmem:[%s59] sm:$0xf]
    %s61 = scalar_lea.vmem [#allocation8], 20
    %v62 = vld [vmem:[%s61] sm:$0xf]
    %s63 = sld [smem:[#allocation2]]
    %v64 = vstv %s63
    %v65 = vmul.f32 %v52, %v64
    %s66 = sld [smem:[#allocation7]]
    %v67 = vstv %s66
    %v68 = vadd.f32 %v65, %v67
    %s69 = sld [smem:[#allocation2 + $0x1]]
    %v70 = vstv %s69
    %v71 = vmul.f32 %v54, %v70
    %v72 = vadd.f32 %v68, %v71
    %s73 = sld [smem:[#allocation2 + $0x2]]
    %v74 = vstv %s73
    %v75 = vmul.f32 %v56, %v74
    %v76 = vadd.f32 %v72, %v75
    %s77 = sld [smem:[#allocation2 + $0x3]]
    %v78 = vstv %s77
    %v79 = vmul.f32 %v58, %v78
    %v80 = vadd.f32 %v76, %v79
    %s81 = sld [smem:[#allocation2 + $0x4]]
    %v82 = vstv %s81
    %v83 = vmul.f32 %v60, %v82
    %v84 = vadd.f32 %v80, %v83
    %s85 = sld [smem:[#allocation2 + $0x5]]
    %v86 = vstv %s85
    %v87 = vmul.f32 %v62, %v86
    %v88 = vadd.f32 %v84, %v87
    %v89 = vmax.f32 %v88, 0.0
    %v90 = vmin.f32 %v89, 255.0
    %v91 = vlaneseq
    %vm92 = vcmp.ge.s32.totalorder %v91, 0
    %vm93 = vcmp.lt.s32.totalorder %v91, 512
    %vm94 = vmand %vm92, %vm93
    %95 = vst.msk [vmem:[#allocation9] sm:$0xf] %vm94, %v90
    %s96 = sld [smem:[#allocation2 + $0x80]]
    %v97 = vstv %s96
    %v98 = vmul.f32 %v52, %v97
    %s99 = sld [smem:[#allocation7 + $0x1]]
    %v100 = vstv %s99
    %v101 = vadd.f32 %v98, %v100
    %s102 = sld [smem:[#allocation2 + $0x81]]
    %v103 = vstv %s102
    %v104 = vmul.f32 %v54, %v103
    %v105 = vadd.f32 %v101, %v104
    %s106 = sld [smem:[#allocation2 + $0x82]]
    %v107 = vstv %s106
    %v108 = vmul.f32 %v56, %v107
    %v109 = vadd.f32 %v105, %v108
    %s110 = sld [smem:[#allocation2 + $0x83]]
    %v111 = vstv %s110
    %v112 = vmul.f32 %v58, %v111
    %v113 = vadd.f32 %v109, %v112
    %s114 = sld [smem:[#allocation2 + $0x84]]
    %v115 = vstv %s114
    %v116 = vmul.f32 %v60, %v115
    %v117 = vadd.f32 %v113, %v116
    %s118 = sld [smem:[#allocation2 + $0x85]]
    %v119 = vstv %s118
    %v120 = vmul.f32 %v62, %v119
    %v121 = vadd.f32 %v117, %v120
    %v122 = vmax.f32 %v121, 0.0
    %v123 = vmin.f32 %v122, 255.0
    %s124 = scalar_lea.vmem [#allocation9], 4
    %125 = vst.msk [vmem:[%s124] sm:$0xf] %vm94, %v123
    %s126 = sld [smem:[#allocation2 + $0x100]]
    %v127 = vstv %s126
    %v128 = vmul.f32 %v52, %v127
    %s129 = sld [smem:[#allocation7 + $0x2]]
    %v130 = vstv %s129
    %v131 = vadd.f32 %v128, %v130
    %s132 = sld [smem:[#allocation2 + $0x101]]
    %v133 = vstv %s132
    %v134 = vmul.f32 %v54, %v133
    %v135 = vadd.f32 %v131, %v134
    %s136 = sld [smem:[#allocation2 + $0x102]]
    %v137 = vstv %s136
    %v138 = vmul.f32 %v56, %v137
    %v139 = vadd.f32 %v135, %v138
    %s140 = sld [smem:[#allocation2 + $0x103]]
    %v141 = vstv %s140
    %v142 = vmul.f32 %v58, %v141
    %v143 = vadd.f32 %v139, %v142
    %s144 = sld [smem:[#allocation2 + $0x104]]
    %v145 = vstv %s144
    %v146 = vmul.f32 %v60, %v145
    %v147 = vadd.f32 %v143, %v146
    %s148 = sld [smem:[#allocation2 + $0x105]]
    %v149 = vstv %s148
    %v150 = vmul.f32 %v62, %v149
    %v151 = vadd.f32 %v147, %v150
    %v152 = vmax.f32 %v151, 0.0
    %v153 = vmin.f32 %v152, 255.0
    %s154 = scalar_lea.vmem [#allocation9], 8
    %155 = vst.msk [vmem:[%s154] sm:$0xf] %vm94, %v153
    %s156 = scalar_lea.vmem [#allocation9], 12
    %157 = vst.msk [vmem:[%s156] sm:$0xf] %vm94, 255.0
    // Predicated region
    $region26: #{tpu_custom_call.1} parent=1 // pred_check
      _
    $region27: #{tpu_custom_call.1} parent=1 // pred_check_branch
      %159 = sbr.rel (0) target = $region29
    $region28: #{tpu_custom_call.1} parent=1 // pred_region
      %s161 = ssub.s32 256, 256
      %162 = vsyncadd [#allocation4], %s161
      %s163 = sshll.u32 [#allocation9], 4
      %s164 = int_to_ptr.vmem [resolvable:$true] %s163
      %169 = dma.vmem_to_hbm [thread:$0]  %s164, 256, %s3, [#allocation4], 64, 64, 4
    $region29: #{tpu_custom_call.1} parent=1 // pred_fallthru
      _
    // Predicated region
    $region30: #{tpu_custom_call.1} parent=1 // pred_check
      _
    $region31: #{tpu_custom_call.1} parent=1 // pred_check_branch
      %171 = sbr.rel (0) target = $region33
    $region32: #{tpu_custom_call.1} parent=1 // pred_region
      %172 = dma.done [#allocation4], 256
    $region33: #{tpu_custom_call.1} parent=1 // pred_fallthru
      _
    %173 = vsyncpa [#allocation3], 1
    %174 = vsyncpa [#allocation4], 1
    %175 = vsyncpa [#allocation5], 1
    %176 = vsyncpa [#allocation6], 1

</llo_original>
